<compile_context>
chip_gen: v7x
topology: tpu7x:2x2x1
jax: 0.10.0
libtpu: 0.0.40
codegen_flags: <defaults>
</compile_context>

<pallas_src>
import functools

import jax
import jax.numpy as jnp
from jax.experimental import pallas as pl
from jax.experimental.pallas import tpu as pltpu


def _mlp_kernel(x_ref, w0_ref, b0_ref, wh_ref, bh_ref, wl_ref, bl_ref, o_ref,
                *, input_dim, n_stacked):
    """Transposed MLP: activations are (features, batch_tile), lane-dense."""
    x = x_ref[...]                       # (D, TN) raw inputs (norm folded into W0/b0)
    w0 = w0_ref[...]                     # (H, D)
    b0 = b0_ref[...]                     # (H, 1)

    if input_dim == 1:
        # K=1 "matmul" is a rank-1 broadcast: do it on the VPU, not the MXU.
        h = jnp.tanh(w0 * x + b0)        # (H,1)*(1,TN) -> (H,TN)
    else:
        h = jnp.tanh(jnp.dot(w0, x, preferred_element_type=jnp.float32) + b0)

    # Dense hidden layers on the MXU (unrolled at trace time).
    for k in range(n_stacked):
        h = jnp.tanh(
            jnp.dot(wh_ref[k], h, preferred_element_type=jnp.float32)
            + bh_ref[k]
        )

    # TODO(synk): nn.Dropout(p=fdrop=0) is the identity (and identity in eval
    # mode regardless); no dropout mask is generated here.

    # Output layer (out_dim == 1): VPU multiply + sublane reduce.
    # Denormalization is already folded into wl/bl by the wrapper.
    o_ref[...] = jnp.sum(wl_ref[...] * h, axis=0, keepdims=True) + bl_ref[...]


def net_forward(x, params, bounds, *, tn=1024):
    """Forward pass of Net.

    x:      (N, input_dim) float32.
    params: list of (W, b) in PyTorch nn.Linear layout: W (out, in), b (out,).
    bounds: (lb, ub, ylb, yub).  NOTE: like the PyTorch module, ub == lb (the
            module's default bounds (0,0,0,0)) divides by zero.
    """
    x = jnp.asarray(x, jnp.float32)
    n, d = x.shape
    bounds = jnp.asarray(bounds, jnp.float32)
    lb, ub, ylb, yub = bounds[0], bounds[1], bounds[2], bounds[3]

    # ---- fold input normalization into layer 0 (done once, on the weights) ----
    a = 2.0 / (ub - lb)
    c = -2.0 * lb / (ub - lb) - 1.0
    w0, b0 = params[0]                                   # (H, D), (H,)
    w0 = jnp.asarray(w0, jnp.float32)
    b0 = jnp.asarray(b0, jnp.float32)
    w0f = a * w0                                         # (H, D)
    b0f = (b0 + c * w0.sum(axis=1))[:, None]             # (H, 1)

    # ---- fold output denormalization into the last layer ----
    wl, bl = params[-1]                                  # (1, H), (1,)
    wl = jnp.asarray(wl, jnp.float32)
    bl = jnp.asarray(bl, jnp.float32)
    out_dim = wl.shape[0]
    assert out_dim == 1, "Net hardcodes output_dim = 1"
    s = 0.5 * (yub - ylb)
    wlf = (s * wl).T                                     # (H, 1) pre-transposed
    blf = (s * (bl + 1.0) + ylb).reshape(1, 1)           # (1, 1)

    # ---- stack the uniform hidden layers into single resident VMEM arrays ----
    hidden = params[1:-1]
    h_dim = w0.shape[0]
    assert all(w.shape == (h_dim, h_dim) for w, _ in hidden), (
        "kernel assumes uniform hidden widths (module default Uvec=[40]*5)")
    wh = jnp.stack([jnp.asarray(w, jnp.float32) for w, _ in hidden])             # (L,H,H)
    bh = jnp.stack([jnp.asarray(b, jnp.float32) for _, b in hidden])[:, :, None]  # (L,H,1)
    n_stacked = len(hidden)

    # ---- transpose + pad the batch so tiles are lane-dense multiples of 128 ----
    # Clamp the tile to the 128-aligned batch so small batches don't pad to a
    # full default-size tile.
    n_128 = int(pl.cdiv(n, 128)) * 128
    tn = max(128, min(tn, n_128))
    n_pad = int(pl.cdiv(n, tn)) * tn
    xt = jnp.zeros((d, n_pad), jnp.float32).at[:, :n].set(x.T)

    grid = (n_pad // tn,)
    kernel = functools.partial(_mlp_kernel, input_dim=d, n_stacked=n_stacked)

    # Advisory cost hint for the XLA scheduler (flops / tanh / bytes).
    flops = n_pad * (2 * d * h_dim + n_stacked * 2 * h_dim * h_dim + 2 * h_dim)
    transcendentals = n_pad * (n_stacked + 1) * h_dim
    bytes_accessed = 4 * (n_pad * (d + 1)
                          + h_dim * d + h_dim
                          + n_stacked * (h_dim * h_dim + h_dim)
                          + h_dim + 1)

    out_t = pl.pallas_call(
        kernel,
        out_shape=jax.ShapeDtypeStruct((1, n_pad), jnp.float32),
        grid=grid,
        in_specs=[
            pl.BlockSpec((d, tn), lambda i: (0, i)),                    # x: streamed
            pl.BlockSpec((h_dim, d), lambda i: (0, 0)),                 # resident
            pl.BlockSpec((h_dim, 1), lambda i: (0, 0)),                 # resident
            pl.BlockSpec((n_stacked, h_dim, h_dim), lambda i: (0, 0, 0)),
            pl.BlockSpec((n_stacked, h_dim, 1), lambda i: (0, 0, 0)),
            pl.BlockSpec((h_dim, 1), lambda i: (0, 0)),
            pl.BlockSpec((1, 1), lambda i: (0, 0)),
        ],
        out_specs=pl.BlockSpec((1, tn), lambda i: (0, i)),              # out: streamed
        compiler_params=pltpu.CompilerParams(
            dimension_semantics=("parallel",)),    # megacore sharding on v7x
        cost_estimate=pl.CostEstimate(flops=int(flops),
                                      transcendentals=int(transcendentals),
                                      bytes_accessed=int(bytes_accessed)),
    )(xt, w0f, b0f, wh, bh, wlf, blf)

    # (1, n_pad) -> (n, 1); row-major reshape, no transpose needed for out_dim=1.
    return out_t.reshape(n_pad, 1)[:n]


def init_params(key, input_dim, uvec, output_dim):
    """Deterministic init of the 6 Linear layers in PyTorch layout (W: (out,in))."""
    dims = [input_dim] + list(uvec) + [output_dim]
    params = []
    for i in range(len(dims) - 1):
        key, kw, kb = jax.random.split(key, 3)
        fan_in, fan_out = dims[i], dims[i + 1]
        bound = 1.0 / (fan_in ** 0.5)
        w = jax.random.uniform(kw, (fan_out, fan_in), jnp.float32, -bound, bound)
        b = jax.random.uniform(kb, (fan_out,), jnp.float32, -bound, bound)
        params.append((w, b))
    return params


def net_forward_ref(x, params, bounds):
    """Pure-JAX reference of the same forward pass (PyTorch-layout weights)."""
    lb, ub, ylb, yub = bounds
    h = 2.0 * (x - lb) / (ub - lb) - 1.0
    for w, b in params[:-1]:
        h = jnp.tanh(h @ w.T + b)
    w, b = params[-1]
    h = h @ w.T + b
    return 0.5 * ((h + 1.0) * (yub - ylb)) + ylb


if __name__ == "__main__":
    key = jax.random.PRNGKey(0)

    # Module defaults: input_dim=1, Uvec=[40]*5, output_dim=1.
    input_dim = 1
    uvec = [40] * 5
    output_dim = 1
    batch = 300           # small; exercises padding (->384) and a 3-step grid with tn=128

    key, kx, kp = jax.random.split(key, 3)
    x = jax.random.uniform(kx, (batch, input_dim), jnp.float32, 0.0, 1.0)
    params = init_params(kp, input_dim, uvec, output_dim)

    # bounds = (lb, ub, ylb, yub); the module default (0,0,0,0) divides by zero
    # (same in PyTorch), so use a non-degenerate normalization range here.
    bounds = jnp.array([0.0, 1.0, -1.0, 1.0], dtype=jnp.float32)

    out = jax.block_until_ready(net_forward(x, params, bounds, tn=128))
    ref = net_forward_ref(x, params, bounds)

    assert out.shape == (batch, output_dim)
    assert jnp.allclose(out, ref, atol=1e-4, rtol=1e-4), "mismatch vs JAX ref"

    print("KERNEL_OK")
</pallas_src>

<mosaic_0001>
module attributes {stable_mosaic.version = 11 : i64} {
  func.func @_mlp_kernel(%arg0: i32, %arg1: memref<1x128xf32, #tpu.memory_space<vmem>>, %arg2: memref<40x1xf32, #tpu.memory_space<vmem>>, %arg3: memref<40x1xf32, #tpu.memory_space<vmem>>, %arg4: memref<4x40x40xf32, #tpu.memory_space<vmem>>, %arg5: memref<4x40x1xf32, #tpu.memory_space<vmem>>, %arg6: memref<40x1xf32, #tpu.memory_space<vmem>>, %arg7: memref<1x1xf32, #tpu.memory_space<vmem>>, %arg8: memref<1x128xf32, #tpu.memory_space<vmem>>) attributes {dimension_semantics = [#tpu.dimension_semantics<parallel>], iteration_bounds = array<i64: 3>, scalar_prefetch = 0 : i64, scratch_operands = 0 : i64, tpu.core_type = #tpu.core_type<tc>, window_params = [{transform_indices = @transform_0, window_bounds = array<i64: 1, 128>}, {pipeline_mode = #tpu.pipeline_mode<synchronous>, transform_indices = @transform_1, window_bounds = array<i64: 40, 1>}, {pipeline_mode = #tpu.pipeline_mode<synchronous>, transform_indices = @transform_2, window_bounds = array<i64: 40, 1>}, {pipeline_mode = #tpu.pipeline_mode<synchronous>, transform_indices = @transform_3, window_bounds = array<i64: 4, 40, 40>}, {pipeline_mode = #tpu.pipeline_mode<synchronous>, transform_indices = @transform_4, window_bounds = array<i64: 4, 40, 1>}, {pipeline_mode = #tpu.pipeline_mode<synchronous>, transform_indices = @transform_5, window_bounds = array<i64: 40, 1>}, {pipeline_mode = #tpu.pipeline_mode<synchronous>, transform_indices = @transform_6, window_bounds = array<i64: 1, 1>}, {transform_indices = @transform_7, window_bounds = array<i64: 1, 128>}]} {
    %c0 = arith.constant 0 : index
    %c0_0 = arith.constant 0 : index
    %0 = vector.load %arg1[%c0, %c0_0] : memref<1x128xf32, #tpu.memory_space<vmem>>, vector<1x128xf32>
    %c0_1 = arith.constant 0 : index
    %c0_2 = arith.constant 0 : index
    %1 = vector.load %arg2[%c0_1, %c0_2] : memref<40x1xf32, #tpu.memory_space<vmem>>, vector<40x1xf32>
    %c0_3 = arith.constant 0 : index
    %c0_4 = arith.constant 0 : index
    %2 = vector.load %arg3[%c0_3, %c0_4] : memref<40x1xf32, #tpu.memory_space<vmem>>, vector<40x1xf32>
    %3 = vector.broadcast %1 : vector<40x1xf32> to vector<40x128xf32>
    %4 = vector.broadcast %0 : vector<1x128xf32> to vector<40x128xf32>
    %5 = arith.mulf %3, %4 : vector<40x128xf32>
    %6 = vector.broadcast %2 : vector<40x1xf32> to vector<40x128xf32>
    %7 = arith.addf %5, %6 : vector<40x128xf32>
    %8 = math.tanh %7 : vector<40x128xf32>
    %c0_5 = arith.constant 0 : index
    %c0_6 = arith.constant 0 : index
    %c0_7 = arith.constant 0 : index
    %9 = vector.load %arg4[%c0_5, %c0_6, %c0_7] : memref<4x40x40xf32, #tpu.memory_space<vmem>>, vector<1x40x40xf32>
    %10 = vector.shape_cast %9 : vector<1x40x40xf32> to vector<40x40xf32>
    %cst = arith.constant dense<0.000000e+00> : vector<40x128xf32>
    %11 = tpu.matmul %10, %8, %cst {dimension_numbers = #tpu.dot_dimension_numbers<[1], [0], [0], [1], [0, 0, 1, 1], [], []>} : vector<40x40xf32>, vector<40x128xf32>, vector<40x128xf32> -> vector<40x128xf32>
    %c0_8 = arith.constant 0 : index
    %c0_9 = arith.constant 0 : index
    %c0_10 = arith.constant 0 : index
    %12 = vector.load %arg5[%c0_8, %c0_9, %c0_10] : memref<4x40x1xf32, #tpu.memory_space<vmem>>, vector<1x40x1xf32>
    %13 = vector.shape_cast %12 : vector<1x40x1xf32> to vector<40x1xf32>
    %14 = vector.broadcast %13 : vector<40x1xf32> to vector<40x128xf32>
    %15 = arith.addf %11, %14 : vector<40x128xf32>
    %16 = math.tanh %15 : vector<40x128xf32>
    %c1 = arith.constant 1 : index
    %c0_11 = arith.constant 0 : index
    %c0_12 = arith.constant 0 : index
    %17 = vector.load %arg4[%c1, %c0_11, %c0_12] : memref<4x40x40xf32, #tpu.memory_space<vmem>>, vector<1x40x40xf32>
    %18 = vector.shape_cast %17 : vector<1x40x40xf32> to vector<40x40xf32>
    %cst_13 = arith.constant dense<0.000000e+00> : vector<40x128xf32>
    %19 = tpu.matmul %18, %16, %cst_13 {dimension_numbers = #tpu.dot_dimension_numbers<[1], [0], [0], [1], [0, 0, 1, 1], [], []>} : vector<40x40xf32>, vector<40x128xf32>, vector<40x128xf32> -> vector<40x128xf32>
    %c1_14 = arith.constant 1 : index
    %c0_15 = arith.constant 0 : index
    %c0_16 = arith.constant 0 : index
    %20 = vector.load %arg5[%c1_14, %c0_15, %c0_16] : memref<4x40x1xf32, #tpu.memory_space<vmem>>, vector<1x40x1xf32>
    %21 = vector.shape_cast %20 : vector<1x40x1xf32> to vector<40x1xf32>
    %22 = vector.broadcast %21 : vector<40x1xf32> to vector<40x128xf32>
    %23 = arith.addf %19, %22 : vector<40x128xf32>
    %24 = math.tanh %23 : vector<40x128xf32>
    %c2 = arith.constant 2 : index
    %c0_17 = arith.constant 0 : index
    %c0_18 = arith.constant 0 : index
    %25 = vector.load %arg4[%c2, %c0_17, %c0_18] : memref<4x40x40xf32, #tpu.memory_space<vmem>>, vector<1x40x40xf32>
    %26 = vector.shape_cast %25 : vector<1x40x40xf32> to vector<40x40xf32>
    %cst_19 = arith.constant dense<0.000000e+00> : vector<40x128xf32>
    %27 = tpu.matmul %26, %24, %cst_19 {dimension_numbers = #tpu.dot_dimension_numbers<[1], [0], [0], [1], [0, 0, 1, 1], [], []>} : vector<40x40xf32>, vector<40x128xf32>, vector<40x128xf32> -> vector<40x128xf32>
    %c2_20 = arith.constant 2 : index
    %c0_21 = arith.constant 0 : index
    %c0_22 = arith.constant 0 : index
    %28 = vector.load %arg5[%c2_20, %c0_21, %c0_22] : memref<4x40x1xf32, #tpu.memory_space<vmem>>, vector<1x40x1xf32>
    %29 = vector.shape_cast %28 : vector<1x40x1xf32> to vector<40x1xf32>
    %30 = vector.broadcast %29 : vector<40x1xf32> to vector<40x128xf32>
    %31 = arith.addf %27, %30 : vector<40x128xf32>
    %32 = math.tanh %31 : vector<40x128xf32>
    %c3 = arith.constant 3 : index
    %c0_23 = arith.constant 0 : index
    %c0_24 = arith.constant 0 : index
    %33 = vector.load %arg4[%c3, %c0_23, %c0_24] : memref<4x40x40xf32, #tpu.memory_space<vmem>>, vector<1x40x40xf32>
    %34 = vector.shape_cast %33 : vector<1x40x40xf32> to vector<40x40xf32>
    %cst_25 = arith.constant dense<0.000000e+00> : vector<40x128xf32>
    %35 = tpu.matmul %34, %32, %cst_25 {dimension_numbers = #tpu.dot_dimension_numbers<[1], [0], [0], [1], [0, 0, 1, 1], [], []>} : vector<40x40xf32>, vector<40x128xf32>, vector<40x128xf32> -> vector<40x128xf32>
    %c3_26 = arith.constant 3 : index
    %c0_27 = arith.constant 0 : index
    %c0_28 = arith.constant 0 : index
    %36 = vector.load %arg5[%c3_26, %c0_27, %c0_28] : memref<4x40x1xf32, #tpu.memory_space<vmem>>, vector<1x40x1xf32>
    %37 = vector.shape_cast %36 : vector<1x40x1xf32> to vector<40x1xf32>
    %38 = vector.broadcast %37 : vector<40x1xf32> to vector<40x128xf32>
    %39 = arith.addf %35, %38 : vector<40x128xf32>
    %40 = math.tanh %39 : vector<40x128xf32>
    %c0_29 = arith.constant 0 : index
    %c0_30 = arith.constant 0 : index
    %41 = vector.load %arg6[%c0_29, %c0_30] : memref<40x1xf32, #tpu.memory_space<vmem>>, vector<40x1xf32>
    %42 = vector.broadcast %41 : vector<40x1xf32> to vector<40x128xf32>
    %43 = arith.mulf %42, %40 : vector<40x128xf32>
    %cst_31 = arith.constant dense<0.000000e+00> : vector<128xf32>
    %44 = vector.multi_reduction <add>, %43, %cst_31 [0] : vector<40x128xf32> to vector<128xf32>
    %45 = vector.shape_cast %44 : vector<128xf32> to vector<1x128xf32>
    %c0_32 = arith.constant 0 : index
    %c0_33 = arith.constant 0 : index
    %46 = vector.load %arg7[%c0_32, %c0_33] : memref<1x1xf32, #tpu.memory_space<vmem>>, vector<1x1xf32>
    %47 = vector.broadcast %46 : vector<1x1xf32> to vector<1x128xf32>
    %48 = arith.addf %45, %47 : vector<1x128xf32>
    %c0_34 = arith.constant 0 : index
    %c0_35 = arith.constant 0 : index
    %49 = vector.load %arg8[%c0_34, %c0_35] : memref<1x128xf32, #tpu.memory_space<vmem>>, vector<1x128xf32>
    tpu.vector_store %arg8[%c0_34, %c0_35], %48 {strides = array<i32>} : memref<1x128xf32, #tpu.memory_space<vmem>>, vector<1x128xf32>,
    return
  }
  func.func @transform_0(%arg0: i32) -> (i32, i32) {
    %c0_i32 = arith.constant 0 : i32
    %c0_i32_0 = arith.constant 0 : i32
    return %c0_i32, %arg0 : i32, i32
  }
  func.func @transform_1(%arg0: i32) -> (i32, i32) {
    %c0_i32 = arith.constant 0 : i32
    %c0_i32_0 = arith.constant 0 : i32
    %c0_i32_1 = arith.constant 0 : i32
    return %c0_i32, %c0_i32_0 : i32, i32
  }
  func.func @transform_2(%arg0: i32) -> (i32, i32) {
    %c0_i32 = arith.constant 0 : i32
    %c0_i32_0 = arith.constant 0 : i32
    %c0_i32_1 = arith.constant 0 : i32
    return %c0_i32, %c0_i32_0 : i32, i32
  }
  func.func @transform_3(%arg0: i32) -> (i32, i32, i32) {
    %c0_i32 = arith.constant 0 : i32
    %c0_i32_0 = arith.constant 0 : i32
    %c0_i32_1 = arith.constant 0 : i32
    %c0_i32_2 = arith.constant 0 : i32
    return %c0_i32, %c0_i32_0, %c0_i32_1 : i32, i32, i32
  }
  func.func @transform_4(%arg0: i32) -> (i32, i32, i32) {
    %c0_i32 = arith.constant 0 : i32
    %c0_i32_0 = arith.constant 0 : i32
    %c0_i32_1 = arith.constant 0 : i32
    %c0_i32_2 = arith.constant 0 : i32
    return %c0_i32, %c0_i32_0, %c0_i32_1 : i32, i32, i32
  }
  func.func @transform_5(%arg0: i32) -> (i32, i32) {
    %c0_i32 = arith.constant 0 : i32
    %c0_i32_0 = arith.constant 0 : i32
    %c0_i32_1 = arith.constant 0 : i32
    return %c0_i32, %c0_i32_0 : i32, i32
  }
  func.func @transform_6(%arg0: i32) -> (i32, i32) {
    %c0_i32 = arith.constant 0 : i32
    %c0_i32_0 = arith.constant 0 : i32
    %c0_i32_1 = arith.constant 0 : i32
    return %c0_i32, %c0_i32_0 : i32, i32
  }
  func.func @transform_7(%arg0: i32) -> (i32, i32) {
    %c0_i32 = arith.constant 0 : i32
    %c0_i32_0 = arith.constant 0 : i32
    return %c0_i32, %arg0 : i32, i32
  }
}

</mosaic_0001>

<llo_original>
// kernel: tpu_custom_call.1
$region0: #{tpu_custom_call.1}
  #allocation0 [shape = 'u32[]', space=smem, size = 0x4, offset = 0x4, fixed_abs, tag = 'smem constant byte address 0x4 - core index']
  #allocation1 [shape = 'u32[144,128]{1,0:T(1,128)}', space=vmem, size = 0x12000, scoped, tag = 'internal scratch']
  #allocation2 [shape = 'f32[1,1]{1,0:T(1,128)S(1)}', space=vmem, size = 0x200, scoped, tag = 'scoped memory for tpu_custom_call.1']
  %s0 = inlined_call_operand.vmem [shape: f32[1,384], index: 0, kind: input, shape index: {}]
  %s1 = inlined_call_operand.vmem [shape: f32[40,1], index: 1, kind: input, shape index: {}]
  %s2 = inlined_call_operand.vmem [shape: f32[40,1], index: 2, kind: input, shape index: {}]
  %s3 = inlined_call_operand.vmem [shape: f32[4,40,40], index: 3, kind: input, shape index: {}]
  %s4 = inlined_call_operand.vmem [shape: f32[4,40,1], index: 4, kind: input, shape index: {}]
  %s5 = inlined_call_operand.vmem [shape: f32[40,1], index: 5, kind: input, shape index: {}]
  %s6 = inlined_call_operand.<no memory space> [shape: f32[1,1], index: 6, kind: input, shape index: {}]
  %s7 = inlined_call_operand.hbm [shape: f32[1,384], index: 7, kind: output, shape index: {}]
  %s8 = sld [smem:[#allocation0]]
  $region61: #{tpu_custom_call.1} parent=0
    _
  %s10 = ssub.s32 1, %s8
  %s11 = scalar_select 0, %s10, %s8
  %v12 = vstv %s6
  %13 = vst [vmem:[#allocation2] sm:$0x1] %v12
  $region1: #{tpu_custom_call.1} parent=0
    #allocation3 [shape = 'u8[1024]{0}', space=vmem, size = 0x400, scoped, tag = 'output window, operand 0']
    #allocation4 [shape = 's32[2]{0}', space=sflag, size = 0x8, scoped, tag = 'scoped memory for tpu_custom_call.1']
    %14 = vsyncpa [#allocation4], 0
    %s15 = scalar_lea.sflag [#allocation4], 1
    %16 = vsyncpa %s15, 0
    loop: start=0, step=1, limit=5
    $region2: #{tpu_custom_call.1} parent=1 // loop_pre_header
      _
    $region3: #{tpu_custom_call.1} parent=1 // loop_header
      %s18 = sphi 0, %s22
      %p19 = scmp.ge.s32.totalorder %s18, 5
      %s28 = sphi 0, %s30
      %s31 = sphi 0, %s28
      %s32 = sphi 0, %s31
      %s48 = sphi 0, %s32
      %s52 = sphi 0, %s52
      %s54 = sphi 0, %s52
      %s55 = sphi 0, %s54
      %s69 = sphi 0, %s55
      %s73 = sphi 0, %s73
      %s75 = sphi 0, %s73
      %s76 = sphi 0, %s75
      %s90 = sphi 0, %s76
      %s94 = sphi 0, %s94
      %s96 = sphi 0, %s94
      %s97 = sphi 0, %s96
      %s111 = sphi 0, %s97
      %s115 = sphi 0, %s115
      %s117 = sphi 0, %s115
      %s118 = sphi 0, %s117
      %s132 = sphi 0, %s118
      %s136 = sphi 0, %s136
      %s138 = sphi 0, %s136
      %s139 = sphi 0, %s138
      %s153 = sphi 0, %s139
      %s157 = sphi 0, %s157
      %s159 = sphi 0, %s157
      %s160 = sphi 0, %s159
      %s174 = sphi 0, %s160
      %s180 = sphi 0, %s182
      %s183 = sphi 0, %s180
      %s184 = sphi 0, %s183
      %s200 = sphi 0, %s184
    $region4: #{tpu_custom_call.1} parent=1 // loop_header_branch
      %21 = sbr.rel (%p19) target = $region8
    $region5: #{tpu_custom_call.1} parent=1 // loop_body
      %s23 = ssub.s32 %s18, 1
      %s24 = ssub.s32 %s18, 2
      %s25 = sadd.s32 %s18, 1
      %s26 = ssub.s32 %s18, %s25
      %p27 = scmp.eq.s32.totalorder %s26, 0
      %s29 = sadd.s32 %s28, 1
      %s30 = scalar_select %p27, %s28, %s29
      %p33 = pneg %p27
      %p34 = scmp.eq.s32.totalorder %s18, 2
      %p35 = por %p33, %p34
      %p36 = scmp.ne.s32.totalorder %s28, %s31
      %p37 = scmp.eq.s32.totalorder %s18, 0
      %p38 = por %p36, %p37
      %p39 = scmp.ne.s32.totalorder %s28, %s31
      %p40 = scmp.eq.s32.totalorder %s23, 2
      %p41 = por %p39, %p40
      %p42 = scmp.ne.s32.totalorder %s31, %s32
      %p43 = scmp.eq.s32.totalorder %s23, 0
      %p44 = por %p42, %p43
      %p45 = scmp.ne.s32.totalorder %s31, %s32
      %p46 = scmp.eq.s32.totalorder %s24, 2
      %p47 = por %p45, %p46
      %p49 = scmp.ne.s32.totalorder %s32, %s48
      %p50 = scmp.eq.s32.totalorder %s24, 0
      %p51 = por %p49, %p50
      %s53 = sadd.s32 %s52, 1
      %p56 = scmp.eq.s32.totalorder %s18, 2
      %p57 = scmp.ne.s32.totalorder %s52, %s54
      %p58 = scmp.eq.s32.totalorder %s18, 0
      %p59 = por %p57, %p58
      %p60 = scmp.ne.s32.totalorder %s52, %s54
      %p61 = scmp.eq.s32.totalorder %s23, 2
      %p62 = por %p60, %p61
      %p63 = scmp.ne.s32.totalorder %s54, %s55
      %p64 = scmp.eq.s32.totalorder %s23, 0
      %p65 = por %p63, %p64
      %p66 = scmp.ne.s32.totalorder %s54, %s55
      %p67 = scmp.eq.s32.totalorder %s24, 2
      %p68 = por %p66, %p67
      %p70 = scmp.ne.s32.totalorder %s55, %s69
      %p71 = scmp.eq.s32.totalorder %s24, 0
      %p72 = por %p70, %p71
      %s74 = sadd.s32 %s73, 1
      %p77 = scmp.eq.s32.totalorder %s18, 2
      %p78 = scmp.ne.s32.totalorder %s73, %s75
      %p79 = scmp.eq.s32.totalorder %s18, 0
      %p80 = por %p78, %p79
      %p81 = scmp.ne.s32.totalorder %s73, %s75
      %p82 = scmp.eq.s32.totalorder %s23, 2
      %p83 = por %p81, %p82
      %p84 = scmp.ne.s32.totalorder %s75, %s76
      %p85 = scmp.eq.s32.totalorder %s23, 0
      %p86 = por %p84, %p85
      %p87 = scmp.ne.s32.totalorder %s75, %s76
      %p88 = scmp.eq.s32.totalorder %s24, 2
      %p89 = por %p87, %p88
      %p91 = scmp.ne.s32.totalorder %s76, %s90
      %p92 = scmp.eq.s32.totalorder %s24, 0
      %p93 = por %p91, %p92
      %s95 = sadd.s32 %s94, 1
      %p98 = scmp.eq.s32.totalorder %s18, 2
      %p99 = scmp.ne.s32.totalorder %s94, %s96
      %p100 = scmp.eq.s32.totalorder %s18, 0
      %p101 = por %p99, %p100
      %p102 = scmp.ne.s32.totalorder %s94, %s96
      %p103 = scmp.eq.s32.totalorder %s23, 2
      %p104 = por %p102, %p103
      %p105 = scmp.ne.s32.totalorder %s96, %s97
      %p106 = scmp.eq.s32.totalorder %s23, 0
      %p107 = por %p105, %p106
      %p108 = scmp.ne.s32.totalorder %s96, %s97
      %p109 = scmp.eq.s32.totalorder %s24, 2
      %p110 = por %p108, %p109
      %p112 = scmp.ne.s32.totalorder %s97, %s111
      %p113 = scmp.eq.s32.totalorder %s24, 0
      %p114 = por %p112, %p113
      %s116 = sadd.s32 %s115, 1
      %p119 = scmp.eq.s32.totalorder %s18, 2
      %p120 = scmp.ne.s32.totalorder %s115, %s117
      %p121 = scmp.eq.s32.totalorder %s18, 0
      %p122 = por %p120, %p121
      %p123 = scmp.ne.s32.totalorder %s115, %s117
      %p124 = scmp.eq.s32.totalorder %s23, 2
      %p125 = por %p123, %p124
      %p126 = scmp.ne.s32.totalorder %s117, %s118
      %p127 = scmp.eq.s32.totalorder %s23, 0
      %p128 = por %p126, %p127
      %p129 = scmp.ne.s32.totalorder %s117, %s118
      %p130 = scmp.eq.s32.totalorder %s24, 2
      %p131 = por %p129, %p130
      %p133 = scmp.ne.s32.totalorder %s118, %s132
      %p134 = scmp.eq.s32.totalorder %s24, 0
      %p135 = por %p133, %p134
      %s137 = sadd.s32 %s136, 1
      %p140 = scmp.eq.s32.totalorder %s18, 2
      %p141 = scmp.ne.s32.totalorder %s136, %s138
      %p142 = scmp.eq.s32.totalorder %s18, 0
      %p143 = por %p141, %p142
      %p144 = scmp.ne.s32.totalorder %s136, %s138
      %p145 = scmp.eq.s32.totalorder %s23, 2
      %p146 = por %p144, %p145
      %p147 = scmp.ne.s32.totalorder %s138, %s139
      %p148 = scmp.eq.s32.totalorder %s23, 0
      %p149 = por %p147, %p148
      %p150 = scmp.ne.s32.totalorder %s138, %s139
      %p151 = scmp.eq.s32.totalorder %s24, 2
      %p152 = por %p150, %p151
      %p154 = scmp.ne.s32.totalorder %s139, %s153
      %p155 = scmp.eq.s32.totalorder %s24, 0
      %p156 = por %p154, %p155
      %s158 = sadd.s32 %s157, 1
      %p161 = scmp.eq.s32.totalorder %s18, 2
      %p162 = scmp.ne.s32.totalorder %s157, %s159
      %p163 = scmp.eq.s32.totalorder %s18, 0
      %p164 = por %p162, %p163
      %p165 = scmp.ne.s32.totalorder %s157, %s159
      %p166 = scmp.eq.s32.totalorder %s23, 2
      %p167 = por %p165, %p166
      %p168 = scmp.ne.s32.totalorder %s159, %s160
      %p169 = scmp.eq.s32.totalorder %s23, 0
      %p170 = por %p168, %p169
      %p171 = scmp.ne.s32.totalorder %s159, %s160
      %p172 = scmp.eq.s32.totalorder %s24, 2
      %p173 = por %p171, %p172
      %p175 = scmp.ne.s32.totalorder %s160, %s174
      %p176 = scmp.eq.s32.totalorder %s24, 0
      %p177 = por %p175, %p176
      %s178 = ssub.s32 %s18, %s25
      %p179 = scmp.eq.s32.totalorder %s178, 0
      %s181 = sadd.s32 %s180, 1
      %s182 = scalar_select %p179, %s180, %s181
      %p185 = pneg %p179
      %p186 = scmp.eq.s32.totalorder %s18, 2
      %p187 = por %p185, %p186
      %p188 = scmp.ne.s32.totalorder %s180, %s183
      %p189 = scmp.eq.s32.totalorder %s18, 0
      %p190 = por %p188, %p189
      %p191 = scmp.ne.s32.totalorder %s180, %s183
      %p192 = scmp.eq.s32.totalorder %s23, 2
      %p193 = por %p191, %p192
      %p194 = scmp.ne.s32.totalorder %s183, %s184
      %p195 = scmp.eq.s32.totalorder %s23, 0
      %p196 = por %p194, %p195
      %p197 = scmp.ne.s32.totalorder %s183, %s184
      %p198 = scmp.eq.s32.totalorder %s24, 2
      %p199 = por %p197, %p198
      %p201 = scmp.ne.s32.totalorder %s184, %s200
      %p202 = scmp.eq.s32.totalorder %s24, 0
      %p203 = por %p201, %p202
      %p204 = scmp.le.s32.totalorder 1, %s18
      %p205 = scmp.lt.s32.totalorder %s18, 4
      %p206 = pnand %p204, %p205
      %p207 = pneg %p206
      // Predicated region
      $region9: #{tpu_custom_call.1} parent=5 // pred_check
        _
      $region10: #{tpu_custom_call.1} parent=5 // pred_check_branch
        %209 = sbr.rel (%p206) target = $region12
      $region11: #{tpu_custom_call.1} parent=5 // pred_region
        %s210 = ssub.s32 %s18, 1
        // Predicated region
        $region13: #{tpu_custom_call.1} parent=11 // pred_check
          %p211 = pneg %p65
        $region14: #{tpu_custom_call.1} parent=11 // pred_check_branch
          %213 = sbr.rel (%p211) target = $region16
        $region15: #{tpu_custom_call.1} parent=11 // pred_region
          _
        $region16: #{tpu_custom_call.1} parent=11 // pred_fallthru
          _
        // Predicated region
        $region17: #{tpu_custom_call.1} parent=11 // pred_check
          %p214 = pneg %p86
        $region18: #{tpu_custom_call.1} parent=11 // pred_check_branch
          %216 = sbr.rel (%p214) target = $region20
        $region19: #{tpu_custom_call.1} parent=11 // pred_region
          _
        $region20: #{tpu_custom_call.1} parent=11 // pred_fallthru
          _
        // Predicated region
        $region21: #{tpu_custom_call.1} parent=11 // pred_check
          %p217 = pneg %p107
        $region22: #{tpu_custom_call.1} parent=11 // pred_check_branch
          %219 = sbr.rel (%p217) target = $region24
        $region23: #{tpu_custom_call.1} parent=11 // pred_region
          _
        $region24: #{tpu_custom_call.1} parent=11 // pred_fallthru
          _
        // Predicated region
        $region25: #{tpu_custom_call.1} parent=11 // pred_check
          %p220 = pneg %p128
        $region26: #{tpu_custom_call.1} parent=11 // pred_check_branch
          %222 = sbr.rel (%p220) target = $region28
        $region27: #{tpu_custom_call.1} parent=11 // pred_region
          _
        $region28: #{tpu_custom_call.1} parent=11 // pred_fallthru
          _
        // Predicated region
        $region29: #{tpu_custom_call.1} parent=11 // pred_check
          %p223 = pneg %p149
        $region30: #{tpu_custom_call.1} parent=11 // pred_check_branch
          %225 = sbr.rel (%p223) target = $region32
        $region31: #{tpu_custom_call.1} parent=11 // pred_region
          _
        $region32: #{tpu_custom_call.1} parent=11 // pred_fallthru
          _
        // Predicated region
        $region33: #{tpu_custom_call.1} parent=11 // pred_check
          %p226 = pneg %p170
        $region34: #{tpu_custom_call.1} parent=11 // pred_check_branch
          %228 = sbr.rel (%p226) target = $region36
        $region35: #{tpu_custom_call.1} parent=11 // pred_region
          _
        $region36: #{tpu_custom_call.1} parent=11 // pred_fallthru
          _
      $region12: #{tpu_custom_call.1} parent=5 // pred_fallthru
        _
      %p229 = scmp.lt.s32.totalorder %s18, 3
      // Predicated region
      $region37: #{tpu_custom_call.1} parent=5 // pred_check
        %p230 = pneg %p229
      $region38: #{tpu_custom_call.1} parent=5 // pred_check_branch
        %232 = sbr.rel (%p230) target = $region40
      $region39: #{tpu_custom_call.1} parent=5 // pred_region
        // Predicated region
        $region41: #{tpu_custom_call.1} parent=39 // pred_check
          %p233 = pneg %p38
        $region42: #{tpu_custom_call.1} parent=39 // pred_check_branch
          %235 = sbr.rel (%p233) target = $region44
        $region43: #{tpu_custom_call.1} parent=39 // pred_region
          %p236 = scmp.lt.s32.totalorder %s18, 2
          %s237 = scalar_select %p236, %s18, 2
          %s238 = scalar_lea.vmem %s0, %s237
        $region44: #{tpu_custom_call.1} parent=39 // pred_fallthru
          _
      $region40: #{tpu_custom_call.1} parent=5 // pred_fallthru
        _
      %p239 = scmp.le.s32.totalorder 1, %s18
      %p240 = scmp.lt.s32.totalorder %s18, 4
      %p241 = pnand %p239, %p240
      %p242 = pneg %p241
      // Predicated region
      $region45: #{tpu_custom_call.1} parent=5 // pred_check
        _
      $region46: #{tpu_custom_call.1} parent=5 // pred_check_branch
        %244 = sbr.rel (%p241) target = $region48
      $region47: #{tpu_custom_call.1} parent=5 // pred_region
        %s245 = ssub.s32 %s18, 1
        %p246 = scmp.lt.s32.totalorder %s23, 2
        %s247 = scalar_select %p246, %s23, 2
        %s248 = scalar_lea.vmem %s0, %s247
        %p249 = pneg %p44
        %p250 = pneg %p41
        %p251 = pneg %p65
        %p252 = pneg %p62
        %p253 = pneg %p86
        %p254 = pneg %p83
        %p255 = pneg %p107
        %p256 = pneg %p104
        %p257 = pneg %p128
        %p258 = pneg %p125
        %p259 = pneg %p149
        %p260 = pneg %p146
        %p261 = pneg %p170
        %p262 = pneg %p167
        %p263 = pneg %p196
        %p264 = pneg %p193
        %s265 = sand.u32 %s183, 1
        %s266 = scalar_lea.sflag [#allocation4], %s265
        %s267 = sand.u32 %s183, 1
        %s268 = scalar_lea.vmem [#allocation3], %s267
        %p269 = scmp.lt.s32.totalorder %s23, 2
        %s270 = scalar_select %p269, %s23, 2
        %s271 = scalar_lea.vmem %s0, %s270
        %v272 = vld [vmem:[%s271] sm:$0x1]
        %v273 = vld [vmem:[%s1] sm:$0xff]
        %v274 = vld [vmem:[%s1 + $0x8] sm:$0xff]
        %v275 = vld [vmem:[%s1 + $0x10] sm:$0xff]
        %v276 = vld [vmem:[%s1 + $0x18] sm:$0xff]
        %v277 = vld [vmem:[%s1 + $0x20] sm:$0xff]
        %v278 = vld [vmem:[%s2] sm:$0xff]
        %v279 = vld [vmem:[%s2 + $0x8] sm:$0xff]
        %v280 = vld [vmem:[%s2 + $0x10] sm:$0xff]
        %v281 = vld [vmem:[%s2 + $0x18] sm:$0xff]
        %v282 = vld [vmem:[%s2 + $0x20] sm:$0xff]
        %284 = vset.pattern.permute.xlu0 0
        %285 = vperm.xlu0 %284, %v273
        %v286 = vpop.permute.xlu0 %285
        %289 = vset.pattern.permute.xlu0 0
        %290 = vperm.xlu0 %289, %v274
        %v291 = vpop.permute.xlu0 %290
        %294 = vset.pattern.permute.xlu0 0
        %295 = vperm.xlu0 %294, %v275
        %v296 = vpop.permute.xlu0 %295
        %299 = vset.pattern.permute.xlu0 0
        %300 = vperm.xlu0 %299, %v276
        %v301 = vpop.permute.xlu0 %300
        %304 = vset.pattern.permute.xlu0 0
        %305 = vperm.xlu0 %304, %v277
        %v306 = vpop.permute.xlu0 %305
        %v309 = vlaneseq
        %v310 = vshrl.u32 %v309, 7
        %v311 = vsub.s32 0, %v310
        %v312 = vrot.slane %v272, %v311
        %v314 = vmul.f32 %v286, %v312
        %v315 = vmul.f32 %v291, %v312
        %v316 = vmul.f32 %v296, %v312
        %v317 = vmul.f32 %v301, %v312
        %v318 = vmul.f32 %v306, %v312
        %320 = vset.pattern.permute.xlu0 0
        %321 = vperm.xlu0 %320, %v278
        %v322 = vpop.permute.xlu0 %321
        %325 = vset.pattern.permute.xlu0 0
        %326 = vperm.xlu0 %325, %v279
        %v327 = vpop.permute.xlu0 %326
        %330 = vset.pattern.permute.xlu0 0
        %331 = vperm.xlu0 %330, %v280
        %v332 = vpop.permute.xlu0 %331
        %335 = vset.pattern.permute.xlu0 0
        %336 = vperm.xlu0 %335, %v281
        %v337 = vpop.permute.xlu0 %336
        %340 = vset.pattern.permute.xlu0 0
        %341 = vperm.xlu0 %340, %v282
        %v342 = vpop.permute.xlu0 %341
        %v344 = vadd.f32 %v314, %v322
        %v345 = vadd.f32 %v315, %v327
        %v346 = vadd.f32 %v316, %v332
        %v347 = vadd.f32 %v317, %v337
        %v348 = vadd.f32 %v318, %v342
        %v349 = vtanh.pop %v344
        %v350 = vtanh.pop %v345
        %v351 = vtanh.pop %v346
        %v352 = vtanh.pop %v347
        %v353 = vtanh.pop %v348
        %v354 = vld [vmem:[%s3] sm:$0xff]
        %v355 = vld [vmem:[%s3 + $0x8] sm:$0xff]
        %v356 = vld [vmem:[%s3 + $0x10] sm:$0xff]
        %v357 = vld [vmem:[%s3 + $0x18] sm:$0xff]
        %v358 = vld [vmem:[%s3 + $0x20] sm:$0xff]
        %v359 = vld [vmem:[%s4] sm:$0xff]
        %v360 = vld [vmem:[%s4 + $0x8] sm:$0xff]
        %v361 = vld [vmem:[%s4 + $0x10] sm:$0xff]
        %v362 = vld [vmem:[%s4 + $0x18] sm:$0xff]
        %v363 = vld [vmem:[%s4 + $0x20] sm:$0xff]
        %365 = vset.pattern.permute.xlu0 0
        %366 = vperm.xlu0 %365, %v359
        %v367 = vpop.permute.xlu0 %366
        %370 = vset.pattern.permute.xlu0 0
        %371 = vperm.xlu0 %370, %v360
        %v372 = vpop.permute.xlu0 %371
        %375 = vset.pattern.permute.xlu0 0
        %376 = vperm.xlu0 %375, %v361
        %v377 = vpop.permute.xlu0 %376
        %380 = vset.pattern.permute.xlu0 0
        %381 = vperm.xlu0 %380, %v362
        %v382 = vpop.permute.xlu0 %381
        %385 = vset.pattern.permute.xlu0 0
        %386 = vperm.xlu0 %385, %v363
        %v387 = vpop.permute.xlu0 %386
        %vm389 = vcmask 326656
        %v391 = vsel %vm389, %v354, 0
        %v394 = vsel %vm389, %v355, 0
        %v397 = vsel %vm389, %v356, 0
        %v400 = vsel %vm389, %v357, 0
        %v403 = vsel %vm389, %v358, 0
        %405 = vmatprep.subr.mxu0 0.0
        %406 = vmatpush1.msra.mxu0 %v349
        %407 = vmatprep.subr.mxu0 0.0
        %408 = vmatpush1.msra.mxu0 %v350
        %409 = vmatprep.subr.mxu0 0.0
        %410 = vmatpush1.msra.mxu0 %v351
        %411 = vmatprep.subr.mxu0 0.0
        %412 = vmatpush1.msra.mxu0 %v352
        %413 = vmatprep.subr.mxu0 0.0
        %414 = vmatpush1.msra.mxu0 %v353
        %415 = vmatprep.subr.mxu0 0.0
        %416 = vmatpush1.msra.mxu0 0.0
        %417 = vmatprep.subr.mxu0 0.0
        %418 = vmatpush1.msra.mxu0 0.0
        %419 = vmatprep.subr.mxu0 0.0
        %420 = vmatpush1.msra.mxu0 0.0
        %421 = vmatprep.subr.mxu0 0.0
        %422 = vmatpush1.msra.mxu0 0.0
        %423 = vmatprep.subr.mxu0 0.0
        %424 = vmatpush1.msra.mxu0 0.0
        %425 = vmatprep.subr.mxu0 0.0
        %426 = vmatpush1.msra.mxu0 0.0
        %427 = vmatprep.subr.mxu0 0.0
        %428 = vmatpush1.msra.mxu0 0.0
        %429 = vmatprep.subr.mxu0 0.0
        %430 = vmatpush1.msra.mxu0 0.0
        %431 = vmatprep.subr.mxu0 0.0
        %432 = vmatpush1.msra.mxu0 0.0
        %433 = vmatprep.subr.mxu0 0.0
        %434 = vmatpush1.msra.mxu0 0.0
        %435 = vmatprep.subr.mxu0 0.0
        %436 = vmatpush1.msra.mxu0 0.0
        %437 = vmatprep.subr.mxu0 0.0
        %438 = vmatpush1.msra.mxu0 0.0
        %439 = vmatprep.subr.mxu0 0.0
        %440 = vmatpush1.msra.mxu0 0.0
        %441 = vmatprep.subr.mxu0 0.0
        %442 = vmatpush1.msra.mxu0 0.0
        %443 = vmatprep.subr.mxu0 0.0
        %444 = vmatpush1.msra.mxu0 0.0
        %445 = vmatprep.subr.mxu0 0.0
        %446 = vmatpush1.msra.mxu0 0.0
        %447 = vmatprep.subr.mxu0 0.0
        %448 = vmatpush1.msra.mxu0 0.0
        %449 = vmatprep.subr.mxu0 0.0
        %450 = vmatpush1.msra.mxu0 0.0
        %451 = vmatprep.subr.mxu0 0.0
        %452 = vmatpush1.msra.mxu0 0.0
        %453 = vmatprep.subr.mxu0 0.0
        %454 = vmatpush1.msra.mxu0 0.0
        %455 = vmatprep.subr.mxu0 0.0
        %456 = vmatpush1.msra.mxu0 0.0
        %457 = vmatprep.subr.mxu0 0.0
        %458 = vmatpush1.msra.mxu0 0.0
        %459 = vmatprep.subr.mxu0 0.0
        %460 = vmatpush1.msra.mxu0 0.0
        %461 = vmatprep.subr.mxu0 0.0
        %462 = vmatpush1.msra.mxu0 0.0
        %463 = vmatprep.subr.mxu0 0.0
        %464 = vmatpush1.msra.mxu0 0.0
        %465 = vmatprep.subr.mxu0 0.0
        %466 = vmatpush1.msra.mxu0 0.0
        %467 = vmatprep.subr.mxu0 0.0
        %468 = vmatpush1.msra.mxu0 0.0
        %469 = vmatprep.mubr.f32.mxu0 0.0
        %470 = vmatmul.mubr.f32.gmra.mrb[0].mxu0 %v391
        %v471 = vpop.f32.mrb[0].mxu0
        %v472 = vadd.f32 %v367, %v471
        %v473 = vpop.f32.mrb[0].mxu0
        %474 = vmatprep.mubr.f32.mxu0 0.0
        %475 = vmatmul.mubr.f32.gmra.mrb[0].mxu0 %v394
        %v476 = vpop.f32.mrb[0].mxu0
        %v477 = vadd.f32 %v372, %v476
        %v478 = vpop.f32.mrb[0].mxu0
        %479 = vmatprep.mubr.f32.mxu0 0.0
        %480 = vmatmul.mubr.f32.gmra.mrb[0].mxu0 %v397
        %v481 = vpop.f32.mrb[0].mxu0
        %v482 = vadd.f32 %v377, %v481
        %v483 = vpop.f32.mrb[0].mxu0
        %484 = vmatprep.mubr.f32.mxu0 0.0
        %485 = vmatmul.mubr.f32.gmra.mrb[0].mxu0 %v400
        %v486 = vpop.f32.mrb[0].mxu0
        %v487 = vadd.f32 %v382, %v486
        %v488 = vpop.f32.mrb[0].mxu0
        %489 = vmatprep.mubr.f32.mxu0 0.0
        %490 = vmatmul.mubr.f32.gmra.mrb[0].mxu0 %v403
        %v491 = vpop.f32.mrb[0].mxu0
        %v492 = vadd.f32 %v387, %v491
        %v493 = vpop.f32.mrb[0].mxu0
        %494 = vdwg.mxu0
        %v495 = vtanh.pop %v472
        %v496 = vtanh.pop %v477
        %v497 = vtanh.pop %v482
        %v498 = vtanh.pop %v487
        %v499 = vtanh.pop %v492
        %s500 = scalar_lea.vmem %s3, 40
        %v501 = vld [vmem:[%s500] sm:$0xff]
        %v502 = vld [vmem:[%s500 + $0x8] sm:$0xff]
        %v503 = vld [vmem:[%s500 + $0x10] sm:$0xff]
        %v504 = vld [vmem:[%s500 + $0x18] sm:$0xff]
        %v505 = vld [vmem:[%s500 + $0x20] sm:$0xff]
        %s506 = scalar_lea.vmem %s4, 40
        %v507 = vld [vmem:[%s506] sm:$0xff]
        %v508 = vld [vmem:[%s506 + $0x8] sm:$0xff]
        %v509 = vld [vmem:[%s506 + $0x10] sm:$0xff]
        %v510 = vld [vmem:[%s506 + $0x18] sm:$0xff]
        %v511 = vld [vmem:[%s506 + $0x20] sm:$0xff]
        %513 = vset.pattern.permute.xlu0 0
        %514 = vperm.xlu0 %513, %v507
        %v515 = vpop.permute.xlu0 %514
        %518 = vset.pattern.permute.xlu0 0
        %519 = vperm.xlu0 %518, %v508
        %v520 = vpop.permute.xlu0 %519
        %523 = vset.pattern.permute.xlu0 0
        %524 = vperm.xlu0 %523, %v509
        %v525 = vpop.permute.xlu0 %524
        %528 = vset.pattern.permute.xlu0 0
        %529 = vperm.xlu0 %528, %v510
        %v530 = vpop.permute.xlu0 %529
        %533 = vset.pattern.permute.xlu0 0
        %534 = vperm.xlu0 %533, %v511
        %v535 = vpop.permute.xlu0 %534
        %v538 = vsel %vm389, %v501, 0
        %v541 = vsel %vm389, %v502, 0
        %v544 = vsel %vm389, %v503, 0
        %v547 = vsel %vm389, %v504, 0
        %v550 = vsel %vm389, %v505, 0
        %552 = vmatprep.subr.mxu0 0.0
        %553 = vmatpush1.msra.mxu0 %v495
        %554 = vmatprep.subr.mxu0 0.0
        %555 = vmatpush1.msra.mxu0 %v496
        %556 = vmatprep.subr.mxu0 0.0
        %557 = vmatpush1.msra.mxu0 %v497
        %558 = vmatprep.subr.mxu0 0.0
        %559 = vmatpush1.msra.mxu0 %v498
        %560 = vmatprep.subr.mxu0 0.0
        %561 = vmatpush1.msra.mxu0 %v499
        %562 = vmatprep.subr.mxu0 0.0
        %563 = vmatpush1.msra.mxu0 0.0
        %564 = vmatprep.subr.mxu0 0.0
        %565 = vmatpush1.msra.mxu0 0.0
        %566 = vmatprep.subr.mxu0 0.0
        %567 = vmatpush1.msra.mxu0 0.0
        %568 = vmatprep.subr.mxu0 0.0
        %569 = vmatpush1.msra.mxu0 0.0
        %570 = vmatprep.subr.mxu0 0.0
        %571 = vmatpush1.msra.mxu0 0.0
        %572 = vmatprep.subr.mxu0 0.0
        %573 = vmatpush1.msra.mxu0 0.0
        %574 = vmatprep.subr.mxu0 0.0
        %575 = vmatpush1.msra.mxu0 0.0
        %576 = vmatprep.subr.mxu0 0.0
        %577 = vmatpush1.msra.mxu0 0.0
        %578 = vmatprep.subr.mxu0 0.0
        %579 = vmatpush1.msra.mxu0 0.0
        %580 = vmatprep.subr.mxu0 0.0
        %581 = vmatpush1.msra.mxu0 0.0
        %582 = vmatprep.subr.mxu0 0.0
        %583 = vmatpush1.msra.mxu0 0.0
        %584 = vmatprep.subr.mxu0 0.0
        %585 = vmatpush1.msra.mxu0 0.0
        %586 = vmatprep.subr.mxu0 0.0
        %587 = vmatpush1.msra.mxu0 0.0
        %588 = vmatprep.subr.mxu0 0.0
        %589 = vmatpush1.msra.mxu0 0.0
        %590 = vmatprep.subr.mxu0 0.0
        %591 = vmatpush1.msra.mxu0 0.0
        %592 = vmatprep.subr.mxu0 0.0
        %593 = vmatpush1.msra.mxu0 0.0
        %594 = vmatprep.subr.mxu0 0.0
        %595 = vmatpush1.msra.mxu0 0.0
        %596 = vmatprep.subr.mxu0 0.0
        %597 = vmatpush1.msra.mxu0 0.0
        %598 = vmatprep.subr.mxu0 0.0
        %599 = vmatpush1.msra.mxu0 0.0
        %600 = vmatprep.subr.mxu0 0.0
        %601 = vmatpush1.msra.mxu0 0.0
        %602 = vmatprep.subr.mxu0 0.0
        %603 = vmatpush1.msra.mxu0 0.0
        %604 = vmatprep.subr.mxu0 0.0
        %605 = vmatpush1.msra.mxu0 0.0
        %606 = vmatprep.subr.mxu0 0.0
        %607 = vmatpush1.msra.mxu0 0.0
        %608 = vmatprep.subr.mxu0 0.0
        %609 = vmatpush1.msra.mxu0 0.0
        %610 = vmatprep.subr.mxu0 0.0
        %611 = vmatpush1.msra.mxu0 0.0
        %612 = vmatprep.subr.mxu0 0.0
        %613 = vmatpush1.msra.mxu0 0.0
        %614 = vmatprep.subr.mxu0 0.0
        %615 = vmatpush1.msra.mxu0 0.0
        %616 = vmatprep.mubr.f32.mxu0 0.0
        %617 = vmatmul.mubr.f32.gmra.mrb[0].mxu0 %v538
        %v618 = vpop.f32.mrb[0].mxu0
        %v619 = vadd.f32 %v515, %v618
        %v620 = vpop.f32.mrb[0].mxu0
        %621 = vmatprep.mubr.f32.mxu0 0.0
        %622 = vmatmul.mubr.f32.gmra.mrb[0].mxu0 %v541
        %v623 = vpop.f32.mrb[0].mxu0
        %v624 = vadd.f32 %v520, %v623
        %v625 = vpop.f32.mrb[0].mxu0
        %626 = vmatprep.mubr.f32.mxu0 0.0
        %627 = vmatmul.mubr.f32.gmra.mrb[0].mxu0 %v544
        %v628 = vpop.f32.mrb[0].mxu0
        %v629 = vadd.f32 %v525, %v628
        %v630 = vpop.f32.mrb[0].mxu0
        %631 = vmatprep.mubr.f32.mxu0 0.0
        %632 = vmatmul.mubr.f32.gmra.mrb[0].mxu0 %v547
        %v633 = vpop.f32.mrb[0].mxu0
        %v634 = vadd.f32 %v530, %v633
        %v635 = vpop.f32.mrb[0].mxu0
        %636 = vmatprep.mubr.f32.mxu0 0.0
        %637 = vmatmul.mubr.f32.gmra.mrb[0].mxu0 %v550
        %v638 = vpop.f32.mrb[0].mxu0
        %v639 = vadd.f32 %v535, %v638
        %v640 = vpop.f32.mrb[0].mxu0
        %641 = vdwg.mxu0
        %v642 = vtanh.pop %v619
        %v643 = vtanh.pop %v624
        %v644 = vtanh.pop %v629
        %v645 = vtanh.pop %v634
        %v646 = vtanh.pop %v639
        %s647 = scalar_lea.vmem %s3, 80
        %v648 = vld [vmem:[%s647] sm:$0xff]
        %v649 = vld [vmem:[%s647 + $0x8] sm:$0xff]
        %v650 = vld [vmem:[%s647 + $0x10] sm:$0xff]
        %v651 = vld [vmem:[%s647 + $0x18] sm:$0xff]
        %v652 = vld [vmem:[%s647 + $0x20] sm:$0xff]
        %s653 = scalar_lea.vmem %s4, 80
        %v654 = vld [vmem:[%s653] sm:$0xff]
        %v655 = vld [vmem:[%s653 + $0x8] sm:$0xff]
        %v656 = vld [vmem:[%s653 + $0x10] sm:$0xff]
        %v657 = vld [vmem:[%s653 + $0x18] sm:$0xff]
        %v658 = vld [vmem:[%s653 + $0x20] sm:$0xff]
        %660 = vset.pattern.permute.xlu0 0
        %661 = vperm.xlu0 %660, %v654
        %v662 = vpop.permute.xlu0 %661
        %665 = vset.pattern.permute.xlu0 0
        %666 = vperm.xlu0 %665, %v655
        %v667 = vpop.permute.xlu0 %666
        %670 = vset.pattern.permute.xlu0 0
        %671 = vperm.xlu0 %670, %v656
        %v672 = vpop.permute.xlu0 %671
        %675 = vset.pattern.permute.xlu0 0
        %676 = vperm.xlu0 %675, %v657
        %v677 = vpop.permute.xlu0 %676
        %680 = vset.pattern.permute.xlu0 0
        %681 = vperm.xlu0 %680, %v658
        %v682 = vpop.permute.xlu0 %681
        %v685 = vsel %vm389, %v648, 0
        %v688 = vsel %vm389, %v649, 0
        %v691 = vsel %vm389, %v650, 0
        %v694 = vsel %vm389, %v651, 0
        %v697 = vsel %vm389, %v652, 0
        %699 = vmatprep.subr.mxu0 0.0
        %700 = vmatpush1.msra.mxu0 %v642
        %701 = vmatprep.subr.mxu0 0.0
        %702 = vmatpush1.msra.mxu0 %v643
        %703 = vmatprep.subr.mxu0 0.0
        %704 = vmatpush1.msra.mxu0 %v644
        %705 = vmatprep.subr.mxu0 0.0
        %706 = vmatpush1.msra.mxu0 %v645
        %707 = vmatprep.subr.mxu0 0.0
        %708 = vmatpush1.msra.mxu0 %v646
        %709 = vmatprep.subr.mxu0 0.0
        %710 = vmatpush1.msra.mxu0 0.0
        %711 = vmatprep.subr.mxu0 0.0
        %712 = vmatpush1.msra.mxu0 0.0
        %713 = vmatprep.subr.mxu0 0.0
        %714 = vmatpush1.msra.mxu0 0.0
        %715 = vmatprep.subr.mxu0 0.0
        %716 = vmatpush1.msra.mxu0 0.0
        %717 = vmatprep.subr.mxu0 0.0
        %718 = vmatpush1.msra.mxu0 0.0
        %719 = vmatprep.subr.mxu0 0.0
        %720 = vmatpush1.msra.mxu0 0.0
        %721 = vmatprep.subr.mxu0 0.0
        %722 = vmatpush1.msra.mxu0 0.0
        %723 = vmatprep.subr.mxu0 0.0
        %724 = vmatpush1.msra.mxu0 0.0
        %725 = vmatprep.subr.mxu0 0.0
        %726 = vmatpush1.msra.mxu0 0.0
        %727 = vmatprep.subr.mxu0 0.0
        %728 = vmatpush1.msra.mxu0 0.0
        %729 = vmatprep.subr.mxu0 0.0
        %730 = vmatpush1.msra.mxu0 0.0
        %731 = vmatprep.subr.mxu0 0.0
        %732 = vmatpush1.msra.mxu0 0.0
        %733 = vmatprep.subr.mxu0 0.0
        %734 = vmatpush1.msra.mxu0 0.0
        %735 = vmatprep.subr.mxu0 0.0
        %736 = vmatpush1.msra.mxu0 0.0
        %737 = vmatprep.subr.mxu0 0.0
        %738 = vmatpush1.msra.mxu0 0.0
        %739 = vmatprep.subr.mxu0 0.0
        %740 = vmatpush1.msra.mxu0 0.0
        %741 = vmatprep.subr.mxu0 0.0
        %742 = vmatpush1.msra.mxu0 0.0
        %743 = vmatprep.subr.mxu0 0.0
        %744 = vmatpush1.msra.mxu0 0.0
        %745 = vmatprep.subr.mxu0 0.0
        %746 = vmatpush1.msra.mxu0 0.0
        %747 = vmatprep.subr.mxu0 0.0
        %748 = vmatpush1.msra.mxu0 0.0
        %749 = vmatprep.subr.mxu0 0.0
        %750 = vmatpush1.msra.mxu0 0.0
        %751 = vmatprep.subr.mxu0 0.0
        %752 = vmatpush1.msra.mxu0 0.0
        %753 = vmatprep.subr.mxu0 0.0
        %754 = vmatpush1.msra.mxu0 0.0
        %755 = vmatprep.subr.mxu0 0.0
        %756 = vmatpush1.msra.mxu0 0.0
        %757 = vmatprep.subr.mxu0 0.0
        %758 = vmatpush1.msra.mxu0 0.0
        %759 = vmatprep.subr.mxu0 0.0
        %760 = vmatpush1.msra.mxu0 0.0
        %761 = vmatprep.subr.mxu0 0.0
        %762 = vmatpush1.msra.mxu0 0.0
        %763 = vmatprep.mubr.f32.mxu0 0.0
        %764 = vmatmul.mubr.f32.gmra.mrb[0].mxu0 %v685
        %v765 = vpop.f32.mrb[0].mxu0
        %v766 = vadd.f32 %v662, %v765
        %v767 = vpop.f32.mrb[0].mxu0
        %768 = vmatprep.mubr.f32.mxu0 0.0
        %769 = vmatmul.mubr.f32.gmra.mrb[0].mxu0 %v688
        %v770 = vpop.f32.mrb[0].mxu0
        %v771 = vadd.f32 %v667, %v770
        %v772 = vpop.f32.mrb[0].mxu0
        %773 = vmatprep.mubr.f32.mxu0 0.0
        %774 = vmatmul.mubr.f32.gmra.mrb[0].mxu0 %v691
        %v775 = vpop.f32.mrb[0].mxu0
        %v776 = vadd.f32 %v672, %v775
        %v777 = vpop.f32.mrb[0].mxu0
        %778 = vmatprep.mubr.f32.mxu0 0.0
        %779 = vmatmul.mubr.f32.gmra.mrb[0].mxu0 %v694
        %v780 = vpop.f32.mrb[0].mxu0
        %v781 = vadd.f32 %v677, %v780
        %v782 = vpop.f32.mrb[0].mxu0
        %783 = vmatprep.mubr.f32.mxu0 0.0
        %784 = vmatmul.mubr.f32.gmra.mrb[0].mxu0 %v697
        %v785 = vpop.f32.mrb[0].mxu0
        %v786 = vadd.f32 %v682, %v785
        %v787 = vpop.f32.mrb[0].mxu0
        %788 = vdwg.mxu0
        %v789 = vtanh.pop %v766
        %v790 = vtanh.pop %v771
        %v791 = vtanh.pop %v776
        %v792 = vtanh.pop %v781
        %v793 = vtanh.pop %v786
        %s794 = scalar_lea.vmem %s3, 120
        %v795 = vld [vmem:[%s794] sm:$0xff]
        %v796 = vld [vmem:[%s794 + $0x8] sm:$0xff]
        %v797 = vld [vmem:[%s794 + $0x10] sm:$0xff]
        %v798 = vld [vmem:[%s794 + $0x18] sm:$0xff]
        %v799 = vld [vmem:[%s794 + $0x20] sm:$0xff]
        %s800 = scalar_lea.vmem %s4, 120
        %v801 = vld [vmem:[%s800] sm:$0xff]
        %v802 = vld [vmem:[%s800 + $0x8] sm:$0xff]
        %v803 = vld [vmem:[%s800 + $0x10] sm:$0xff]
        %v804 = vld [vmem:[%s800 + $0x18] sm:$0xff]
        %v805 = vld [vmem:[%s800 + $0x20] sm:$0xff]
        %807 = vset.pattern.permute.xlu0 0
        %808 = vperm.xlu0 %807, %v801
        %v809 = vpop.permute.xlu0 %808
        %812 = vset.pattern.permute.xlu0 0
        %813 = vperm.xlu0 %812, %v802
        %v814 = vpop.permute.xlu0 %813
        %817 = vset.pattern.permute.xlu0 0
        %818 = vperm.xlu0 %817, %v803
        %v819 = vpop.permute.xlu0 %818
        %822 = vset.pattern.permute.xlu0 0
        %823 = vperm.xlu0 %822, %v804
        %v824 = vpop.permute.xlu0 %823
        %827 = vset.pattern.permute.xlu0 0
        %828 = vperm.xlu0 %827, %v805
        %v829 = vpop.permute.xlu0 %828
        %v832 = vsel %vm389, %v795, 0
        %v835 = vsel %vm389, %v796, 0
        %v838 = vsel %vm389, %v797, 0
        %v841 = vsel %vm389, %v798, 0
        %v844 = vsel %vm389, %v799, 0
        %846 = vmatprep.subr.mxu0 0.0
        %847 = vmatpush1.msra.mxu0 %v789
        %848 = vmatprep.subr.mxu0 0.0
        %849 = vmatpush1.msra.mxu0 %v790
        %850 = vmatprep.subr.mxu0 0.0
        %851 = vmatpush1.msra.mxu0 %v791
        %852 = vmatprep.subr.mxu0 0.0
        %853 = vmatpush1.msra.mxu0 %v792
        %854 = vmatprep.subr.mxu0 0.0
        %855 = vmatpush1.msra.mxu0 %v793
        %856 = vmatprep.subr.mxu0 0.0
        %857 = vmatpush1.msra.mxu0 0.0
        %858 = vmatprep.subr.mxu0 0.0
        %859 = vmatpush1.msra.mxu0 0.0
        %860 = vmatprep.subr.mxu0 0.0
        %861 = vmatpush1.msra.mxu0 0.0
        %862 = vmatprep.subr.mxu0 0.0
        %863 = vmatpush1.msra.mxu0 0.0
        %864 = vmatprep.subr.mxu0 0.0
        %865 = vmatpush1.msra.mxu0 0.0
        %866 = vmatprep.subr.mxu0 0.0
        %867 = vmatpush1.msra.mxu0 0.0
        %868 = vmatprep.subr.mxu0 0.0
        %869 = vmatpush1.msra.mxu0 0.0
        %870 = vmatprep.subr.mxu0 0.0
        %871 = vmatpush1.msra.mxu0 0.0
        %872 = vmatprep.subr.mxu0 0.0
        %873 = vmatpush1.msra.mxu0 0.0
        %874 = vmatprep.subr.mxu0 0.0
        %875 = vmatpush1.msra.mxu0 0.0
        %876 = vmatprep.subr.mxu0 0.0
        %877 = vmatpush1.msra.mxu0 0.0
        %878 = vmatprep.subr.mxu0 0.0
        %879 = vmatpush1.msra.mxu0 0.0
        %880 = vmatprep.subr.mxu0 0.0
        %881 = vmatpush1.msra.mxu0 0.0
        %882 = vmatprep.subr.mxu0 0.0
        %883 = vmatpush1.msra.mxu0 0.0
        %884 = vmatprep.subr.mxu0 0.0
        %885 = vmatpush1.msra.mxu0 0.0
        %886 = vmatprep.subr.mxu0 0.0
        %887 = vmatpush1.msra.mxu0 0.0
        %888 = vmatprep.subr.mxu0 0.0
        %889 = vmatpush1.msra.mxu0 0.0
        %890 = vmatprep.subr.mxu0 0.0
        %891 = vmatpush1.msra.mxu0 0.0
        %892 = vmatprep.subr.mxu0 0.0
        %893 = vmatpush1.msra.mxu0 0.0
        %894 = vmatprep.subr.mxu0 0.0
        %895 = vmatpush1.msra.mxu0 0.0
        %896 = vmatprep.subr.mxu0 0.0
        %897 = vmatpush1.msra.mxu0 0.0
        %898 = vmatprep.subr.mxu0 0.0
        %899 = vmatpush1.msra.mxu0 0.0
        %900 = vmatprep.subr.mxu0 0.0
        %901 = vmatpush1.msra.mxu0 0.0
        %902 = vmatprep.subr.mxu0 0.0
        %903 = vmatpush1.msra.mxu0 0.0
        %904 = vmatprep.subr.mxu0 0.0
        %905 = vmatpush1.msra.mxu0 0.0
        %906 = vmatprep.subr.mxu0 0.0
        %907 = vmatpush1.msra.mxu0 0.0
        %908 = vmatprep.subr.mxu0 0.0
        %909 = vmatpush1.msra.mxu0 0.0
        %910 = vmatprep.mubr.f32.mxu0 0.0
        %911 = vmatmul.mubr.f32.gmra.mrb[0].mxu0 %v832
        %v912 = vpop.f32.mrb[0].mxu0
        %v913 = vadd.f32 %v809, %v912
        %v914 = vpop.f32.mrb[0].mxu0
        %915 = vmatprep.mubr.f32.mxu0 0.0
        %916 = vmatmul.mubr.f32.gmra.mrb[0].mxu0 %v835
        %v917 = vpop.f32.mrb[0].mxu0
        %v918 = vadd.f32 %v814, %v917
        %v919 = vpop.f32.mrb[0].mxu0
        %920 = vmatprep.mubr.f32.mxu0 0.0
        %921 = vmatmul.mubr.f32.gmra.mrb[0].mxu0 %v838
        %v922 = vpop.f32.mrb[0].mxu0
        %v923 = vadd.f32 %v819, %v922
        %v924 = vpop.f32.mrb[0].mxu0
        %925 = vmatprep.mubr.f32.mxu0 0.0
        %926 = vmatmul.mubr.f32.gmra.mrb[0].mxu0 %v841
        %v927 = vpop.f32.mrb[0].mxu0
        %v928 = vadd.f32 %v824, %v927
        %v929 = vpop.f32.mrb[0].mxu0
        %930 = vmatprep.mubr.f32.mxu0 0.0
        %931 = vmatmul.mubr.f32.gmra.mrb[0].mxu0 %v844
        %v932 = vpop.f32.mrb[0].mxu0
        %v933 = vadd.f32 %v829, %v932
        %v934 = vpop.f32.mrb[0].mxu0
        %935 = vdwg.mxu0
        %v936 = vtanh.pop %v913
        %v937 = vtanh.pop %v918
        %v938 = vtanh.pop %v923
        %v939 = vtanh.pop %v928
        %v940 = vtanh.pop %v933
        %v941 = vld [vmem:[%s5] sm:$0xff]
        %v942 = vld [vmem:[%s5 + $0x8] sm:$0xff]
        %v943 = vld [vmem:[%s5 + $0x10] sm:$0xff]
        %v944 = vld [vmem:[%s5 + $0x18] sm:$0xff]
        %v945 = vld [vmem:[%s5 + $0x20] sm:$0xff]
        %947 = vset.pattern.permute.xlu0 0
        %948 = vperm.xlu0 %947, %v941
        %v949 = vpop.permute.xlu0 %948
        %952 = vset.pattern.permute.xlu0 0
        %953 = vperm.xlu0 %952, %v942
        %v954 = vpop.permute.xlu0 %953
        %957 = vset.pattern.permute.xlu0 0
        %958 = vperm.xlu0 %957, %v943
        %v959 = vpop.permute.xlu0 %958
        %962 = vset.pattern.permute.xlu0 0
        %963 = vperm.xlu0 %962, %v944
        %v964 = vpop.permute.xlu0 %963
        %967 = vset.pattern.permute.xlu0 0
        %968 = vperm.xlu0 %967, %v945
        %v969 = vpop.permute.xlu0 %968
        %v971 = vmul.f32 %v949, %v936
        %v972 = vmul.f32 %v954, %v937
        %v973 = vmul.f32 %v959, %v938
        %v974 = vmul.f32 %v964, %v939
        %v975 = vmul.f32 %v969, %v940
        %v976 = vadd.f32 %v971, %v972
        %v977 = vadd.f32 %v976, %v973
        %v978 = vadd.f32 %v977, %v974
        %v979 = vadd.f32 %v978, %v975
        %v980 = vrot.slane %v979, 4
        %v981 = vadd.f32 %v979, %v980
        %v982 = vrot.slane %v981, 2
        %v983 = vadd.f32 %v981, %v982
        %v984 = vrot.slane %v983, 1
        %v985 = vadd.f32 %v983, %v984
        %v986 = vld [vmem:[#allocation2] sm:$0x1]
        %988 = vset.pattern.permute.xlu0 0
        %989 = vperm.xlu0 %988, %v986
        %v990 = vpop.permute.xlu0 %989
        %v992 = vlaneseq
        %v993 = vshrl.u32 %v992, 7
        %v994 = vsub.s32 0, %v993
        %v995 = vrot.slane %v990, %v994
        %v996 = vadd.f32 %v985, %v995
        %997 = vst [vmem:[%s268] sm:$0x1] %v996
        %s998 = sand.u32 %s183, 1
        %s999 = scalar_lea.sflag [#allocation4], %s998
        %s1000 = sand.u32 %s183, 1
        %s1001 = scalar_lea.vmem [#allocation3], %s1000
        // Predicated region
        $region49: #{tpu_custom_call.1} parent=47 // pred_check
          %p1002 = pneg %p193
        $region50: #{tpu_custom_call.1} parent=47 // pred_check_branch
          %1004 = sbr.rel (%p1002) target = $region52
        $region51: #{tpu_custom_call.1} parent=47 // pred_region
          %s1006 = ssub.s32 16, 16
          %1007 = vsyncadd %s999, %s1006
          %s1008 = smul.addr %s23, 16
          %s1009 = scalar_lea.hbm %s7, %s1008
          %s1011 = sshll.u32 %s1001, 4
          %s1012 = int_to_ptr.vmem [resolvable:$true] %s1011
          %1014 = dma.vmem_to_hbm [thread:$0]  %s1012, 16, %s1009, %s999
        $region52: #{tpu_custom_call.1} parent=47 // pred_fallthru
          _
      $region48: #{tpu_custom_call.1} parent=5 // pred_fallthru
        _
      %p1015 = scmp.le.s32.totalorder 2, %s18
      // Predicated region
      $region53: #{tpu_custom_call.1} parent=5 // pred_check
        %p1016 = pneg %p1015
      $region54: #{tpu_custom_call.1} parent=5 // pred_check_branch
        %1018 = sbr.rel (%p1016) target = $region56
      $region55: #{tpu_custom_call.1} parent=5 // pred_region
        %s1019 = ssub.s32 %s18, 2
        // Predicated region
        $region57: #{tpu_custom_call.1} parent=55 // pred_check
          %p1020 = pneg %p199
        $region58: #{tpu_custom_call.1} parent=55 // pred_check_branch
          %1022 = sbr.rel (%p1020) target = $region60
        $region59: #{tpu_custom_call.1} parent=55 // pred_region
          %s1023 = sand.u32 %s184, 1
          %s1024 = scalar_lea.sflag [#allocation4], %s1023
          %s1025 = sand.u32 %s184, 1
          %s1026 = scalar_lea.vmem [#allocation3], %s1025
          %1027 = dma.done %s1024, 16
        $region60: #{tpu_custom_call.1} parent=55 // pred_fallthru
          _
      $region56: #{tpu_custom_call.1} parent=5 // pred_fallthru
        _
    $region6: #{tpu_custom_call.1} parent=1 // loop_footer
      %s22 = sadd.s32 1, %s18
    $region7: #{tpu_custom_call.1} parent=1 // loop_footer_branch
      %17 = sbr.rel target = $region3
    $region8: #{tpu_custom_call.1} parent=1 // loop_exit
      _
    %1028 = vsyncpa [#allocation4], 1
    %s1029 = scalar_lea.sflag [#allocation4], 1
    %1030 = vsyncpa %s1029, 1

</llo_original>
